<compile_context>
chip_gen: v5e
topology: v5e:2x2
jax: 0.10.0
libtpu: 0.0.40
codegen_flags: <defaults>
</compile_context>

<pallas_src>
import jax
import jax.numpy as jnp
from jax.experimental import pallas as pl
from jax.experimental.pallas import tpu as pltpu

EPS = 1e-5


def _crb_kernel(x_ref, scale_ref, shift_ref, halo_ref, w0_ref, w3_ref, b4_ref,
                o_ref):
    """One (sample, T-block) tile: (C_in, Tt) in -> (C_in, Tt) out."""
    tt = x_ref.shape[-1]
    mxu_dt = w0_ref.dtype
    f32 = jnp.float32

    x = x_ref[...]                                           # (C_in, Tt)

    # conv_0 (1x1, no bias): shared resident weight, one MXU matmul, f32 acc.
    h = jnp.dot(w0_ref[...], x.astype(mxu_dt),
                preferred_element_type=f32)                  # (C_aff, Tt) f32

    # norm_1 (eval) + FiLM folded into a per-sample scale/shift: VPU FMA with a
    # (C_aff, 1) lane-broadcast.  SiLU stays f32 (EUP sigmoid + VPU mul).
    h = h * scale_ref[...] + shift_ref[...]
    h = h * jax.nn.sigmoid(h)

    # conv_3 (k=3, pad=1, no bias) + norm_4 scale folded into the tap weights:
    # three accumulating MXU dots against h and its lane-rolled neighbours.
    hm = h.astype(mxu_dt)                                    # cast once
    col = jax.lax.broadcasted_iota(jnp.int32, hm.shape, 1)
    halo = halo_ref[...]                                     # (C_aff, 2) mxu_dt
    # value at t-1: circular roll by +1, block-edge column comes from the halo.
    h_prev = jnp.where(col == 0, halo[:, 0:1], pltpu.roll(hm, 1, axis=1))
    # value at t+1: pltpu.roll needs a non-negative shift -> roll by Tt-1.
    h_next = jnp.where(col == tt - 1, halo[:, 1:2],
                       pltpu.roll(hm, tt - 1, axis=1))

    y = jnp.dot(w3_ref[0], h_prev, preferred_element_type=f32)
    y = y + jnp.dot(w3_ref[1], hm, preferred_element_type=f32)
    y = y + jnp.dot(w3_ref[2], h_next, preferred_element_type=f32)

    # norm_4 shift (affine=False -> running stats only) + residual add, f32.
    o_ref[...] = (x.astype(f32) + y + b4_ref[...]).astype(o_ref.dtype)


def _pick_t_block(t):
    for cand in (1024, 512, 256, 128):
        if t % cand == 0:
            return cand
    return t


def conditional_residual_block_1d(x, conditioning, params, *,
                                  matmul_dtype=jnp.float32, t_block=None):
    n, c_in, t = x.shape
    c_aff = params["w0"].shape[0]
    f32 = jnp.float32
    if t_block is None:
        t_block = _pick_t_block(t)
    assert t % t_block == 0, "T must be a multiple of the T block size"
    jt = t // t_block

    # ---- wrapper-side folding (tiny XLA glue, not the hot path) --------------
    s1 = params["bn1_gamma"] / jnp.sqrt(params["bn1_var"] + EPS)        # (C_aff,)
    t1 = params["bn1_beta"] - params["bn1_mean"] * s1
    s4 = 1.0 / jnp.sqrt(params["bn4_var"] + EPS)                        # (C_in,)
    t4 = -params["bn4_mean"] * s4

    # Conditioning 1x1 convs (a, b) for the whole batch as one matmul each.
    a = conditioning.astype(f32) @ params["a_w"].T + params["a_b"]      # (N, C_aff)
    b = conditioning.astype(f32) @ params["b_w"].T + params["b_b"]

    scale = a * s1                                                      # (N, C_aff)
    shift = a * t1 + b
    # NOTE: with bf16 matmul operands, s4 is folded into bf16 weights; tiny
    # running variances could amplify rounding (acceptable at the tolerances
    # used here, elementwise math stays f32).

    # Shared, grid-invariant matmul weights (stay resident in VMEM).
    w0m = params["w0"].astype(matmul_dtype)                             # (C_aff, C_in)
    w3 = params["w3"]                                                   # (C_in, C_aff, 3)
    w3f = jnp.stack([w3[:, :, k] * s4[:, None] for k in range(3)],
                    axis=0).astype(matmul_dtype)                        # (3, C_in, C_aff)
    b4 = t4[:, None].astype(f32)                                        # (C_in, 1)

    # Per-(sample, T-block) halo columns of h for the k=3 taps at block edges.
    # h is pointwise in x, so recompute the 2*(J-1) interior boundary columns
    # here (tiny); global edges get 0 == the conv's zero padding.
    j_ids = jnp.arange(jt)
    left_cols = j_ids * t_block - 1                                     # (J,)
    right_cols = (j_ids + 1) * t_block
    valid = jnp.stack([left_cols >= 0, right_cols < t], axis=-1)        # (J, 2)
    cols = jnp.stack([jnp.clip(left_cols, 0, t - 1),
                      jnp.clip(right_cols, 0, t - 1)], axis=-1)         # (J, 2)
    x_cols = x[:, :, cols].astype(matmul_dtype).astype(f32)             # (N, C_in, J, 2)
    h_halo = jnp.einsum('ac,ncjk->najk', w0m.astype(f32), x_cols)       # (N, C_aff, J, 2)
    h_halo = scale[:, :, None, None] * h_halo + shift[:, :, None, None]
    h_halo = h_halo * jax.nn.sigmoid(h_halo)
    h_halo = jnp.where(valid[None, None], h_halo, 0.0)
    halo = jnp.transpose(h_halo, (0, 2, 1, 3)).astype(matmul_dtype)     # (N, J, C_aff, 2)

    scale3 = scale[:, :, None].astype(f32)                              # (N, C_aff, 1)
    shift3 = shift[:, :, None].astype(f32)

    return pl.pallas_call(
        _crb_kernel,
        out_shape=jax.ShapeDtypeStruct((n, c_in, t), x.dtype),
        grid_spec=pltpu.PrefetchScalarGridSpec(
            num_scalar_prefetch=0,
            grid=(n, jt),
            in_specs=[
                pl.BlockSpec((None, c_in, t_block), lambda i, j: (i, 0, j)),     # x tile
                pl.BlockSpec((None, c_aff, 1), lambda i, j: (i, 0, 0)),          # FiLM scale
                pl.BlockSpec((None, c_aff, 1), lambda i, j: (i, 0, 0)),          # FiLM shift
                pl.BlockSpec((None, None, c_aff, 2), lambda i, j: (i, j, 0, 0)), # halo cols
                pl.BlockSpec((c_aff, c_in), lambda i, j: (0, 0)),                # w0 (resident)
                pl.BlockSpec((3, c_in, c_aff), lambda i, j: (0, 0, 0)),          # conv_3 taps
                pl.BlockSpec((c_in, 1), lambda i, j: (0, 0)),                    # norm_4 shift
            ],
            out_specs=pl.BlockSpec((None, c_in, t_block), lambda i, j: (i, 0, j)),
        ),
        compiler_params=pltpu.CompilerParams(
            dimension_semantics=("parallel", "parallel"),
            vmem_limit_bytes=48 * 1024 * 1024),
    )(x, scale3, shift3, halo, w0m, w3f, b4)


def reference(x, conditioning, params):
    """Pure-JAX reference (eval-mode semantics)."""
    h = jnp.einsum('oc,nct->not', params["w0"], x)
    h = (h - params["bn1_mean"][None, :, None]) / jnp.sqrt(
        params["bn1_var"] + EPS)[None, :, None]
    h = h * params["bn1_gamma"][None, :, None] + params["bn1_beta"][None, :, None]
    a = jnp.einsum('oc,nc->no', params["a_w"], conditioning) + params["a_b"]
    b = jnp.einsum('oc,nc->no', params["b_w"], conditioning) + params["b_b"]
    h = a[:, :, None] * h + b[:, :, None]
    h = h * jax.nn.sigmoid(h)
    t = x.shape[2]
    hp = jnp.pad(h, ((0, 0), (0, 0), (1, 1)))
    y = sum(jnp.einsum('oc,nct->not', params["w3"][:, :, k], hp[:, :, k:k + t])
            for k in range(3))
    y = (y - params["bn4_mean"][None, :, None]) / jnp.sqrt(
        params["bn4_var"] + EPS)[None, :, None]
    return x + y


def make_params(key, c_in, c_cond, c_aff):
    ks = jax.random.split(key, 12)
    f = jnp.float32
    return {
        "w0": jax.random.normal(ks[0], (c_aff, c_in), f) * 0.2,
        "bn1_gamma": 1.0 + 0.1 * jax.random.normal(ks[1], (c_aff,), f),
        "bn1_beta": 0.1 * jax.random.normal(ks[2], (c_aff,), f),
        "bn1_mean": 0.1 * jax.random.normal(ks[3], (c_aff,), f),
        "bn1_var": 0.5 + jax.random.uniform(ks[4], (c_aff,), f),
        # Module __init__ zero-inits a/b weights (a.bias=1, b.bias=0); use
        # small random values here so the conditioning path is exercised.
        "a_w": 0.1 * jax.random.normal(ks[5], (c_aff, c_cond), f),
        "a_b": jnp.ones((c_aff,), f) + 0.05 * jax.random.normal(ks[6], (c_aff,), f),
        "b_w": 0.1 * jax.random.normal(ks[7], (c_aff, c_cond), f),
        "b_b": 0.05 * jax.random.normal(ks[8], (c_aff,), f),
        "w3": jax.random.normal(ks[9], (c_in, c_aff, 3), f) * 0.1,
        "bn4_mean": 0.1 * jax.random.normal(ks[10], (c_in,), f),
        "bn4_var": 0.5 + jax.random.uniform(ks[11], (c_in,), f),
    }


if __name__ == "__main__":
    N, C_IN, C_COND, C_AFF, T = 2, 8, 8, 16, 512

    key = jax.random.PRNGKey(0)
    kx, kc, kp = jax.random.split(key, 3)
    x = jax.random.normal(kx, (N, C_IN, T), jnp.float32)
    conditioning = jax.random.normal(kc, (N, C_COND), jnp.float32)
    params = make_params(kp, C_IN, C_COND, C_AFF)

    ref = jax.block_until_ready(reference(x, conditioning, params))

    # f32 path, 4 T-blocks of 128 lanes: exercises the k=3 halo across block
    # edges (interior blocks use both neighbours, edge blocks use zero pad).
    out_f32 = jax.block_until_ready(
        conditional_residual_block_1d(x, conditioning, params,
                                      matmul_dtype=jnp.float32, t_block=128))
    assert out_f32.shape == (N, C_IN, T)
    err_f32 = float(jnp.max(jnp.abs(out_f32 - ref)))
    assert err_f32 < 1e-3, err_f32

    # f32 path, auto-picked single 512-lane block (lane-dense case).
    out_big = jax.block_until_ready(
        conditional_residual_block_1d(x, conditioning, params,
                                      matmul_dtype=jnp.float32))
    err_big = float(jnp.max(jnp.abs(out_big - ref)))
    assert err_big < 1e-3, err_big

    # bf16 MXU-operand path: only matmul operands rounded to bf16, elementwise
    # math stays f32 -> loose tolerance.
    out_bf16 = jax.block_until_ready(
        conditional_residual_block_1d(x, conditioning, params,
                                      matmul_dtype=jnp.bfloat16, t_block=256))
    err_bf16 = float(jnp.max(jnp.abs(out_bf16 - ref)))
    assert err_bf16 < 0.15, err_bf16

    print("KERNEL_OK")
</pallas_src>

<mosaic_0001>
module attributes {stable_mosaic.version = 11 : i64} {
  func.func @_crb_kernel(%arg0: i32, %arg1: i32, %arg2: memref<1x8x128xf32, #tpu.memory_space<vmem>>, %arg3: memref<1x16x1xf32, #tpu.memory_space<vmem>>, %arg4: memref<1x16x1xf32, #tpu.memory_space<vmem>>, %arg5: memref<1x1x16x2xf32, #tpu.memory_space<vmem>>, %arg6: memref<16x8xf32, #tpu.memory_space<vmem>>, %arg7: memref<3x8x16xf32, #tpu.memory_space<vmem>>, %arg8: memref<8x1xf32, #tpu.memory_space<vmem>>, %arg9: memref<1x8x128xf32, #tpu.memory_space<vmem>>) attributes {dimension_semantics = [#tpu.dimension_semantics<parallel>, #tpu.dimension_semantics<parallel>], iteration_bounds = array<i64: 2, 4>, scalar_prefetch = 0 : i64, scratch_operands = 0 : i64, tpu.core_type = #tpu.core_type<tc>, window_params = [{transform_indices = @transform_0, window_bounds = array<i64: 1, 8, 128>}, {transform_indices = @transform_1, window_bounds = array<i64: 1, 16, 1>}, {transform_indices = @transform_2, window_bounds = array<i64: 1, 16, 1>}, {transform_indices = @transform_3, window_bounds = array<i64: 1, 1, 16, 2>}, {pipeline_mode = #tpu.pipeline_mode<synchronous>, transform_indices = @transform_4, window_bounds = array<i64: 16, 8>}, {pipeline_mode = #tpu.pipeline_mode<synchronous>, transform_indices = @transform_5, window_bounds = array<i64: 3, 8, 16>}, {pipeline_mode = #tpu.pipeline_mode<synchronous>, transform_indices = @transform_6, window_bounds = array<i64: 8, 1>}, {transform_indices = @transform_7, window_bounds = array<i64: 1, 8, 128>}]} {
    %c0 = arith.constant 0 : index
    %c0_0 = arith.constant 0 : index
    %c0_1 = arith.constant 0 : index
    %0 = vector.load %arg2[%c0, %c0_0, %c0_1] : memref<1x8x128xf32, #tpu.memory_space<vmem>>, vector<1x8x128xf32>
    %1 = vector.shape_cast %0 : vector<1x8x128xf32> to vector<8x128xf32>
    %c0_2 = arith.constant 0 : index
    %c0_3 = arith.constant 0 : index
    %2 = vector.load %arg6[%c0_2, %c0_3] : memref<16x8xf32, #tpu.memory_space<vmem>>, vector<16x8xf32>
    %cst = arith.constant dense<0.000000e+00> : vector<16x128xf32>
    %3 = tpu.matmul %2, %1, %cst {dimension_numbers = #tpu.dot_dimension_numbers<[1], [0], [0], [1], [0, 0, 1, 1], [], []>} : vector<16x8xf32>, vector<8x128xf32>, vector<16x128xf32> -> vector<16x128xf32>
    %c0_4 = arith.constant 0 : index
    %c0_5 = arith.constant 0 : index
    %c0_6 = arith.constant 0 : index
    %4 = vector.load %arg3[%c0_4, %c0_5, %c0_6] : memref<1x16x1xf32, #tpu.memory_space<vmem>>, vector<1x16x1xf32>
    %5 = vector.shape_cast %4 : vector<1x16x1xf32> to vector<16x1xf32>
    %6 = vector.broadcast %5 : vector<16x1xf32> to vector<16x128xf32>
    %7 = arith.mulf %3, %6 : vector<16x128xf32>
    %c0_7 = arith.constant 0 : index
    %c0_8 = arith.constant 0 : index
    %c0_9 = arith.constant 0 : index
    %8 = vector.load %arg4[%c0_7, %c0_8, %c0_9] : memref<1x16x1xf32, #tpu.memory_space<vmem>>, vector<1x16x1xf32>
    %9 = vector.shape_cast %8 : vector<1x16x1xf32> to vector<16x1xf32>
    %10 = vector.broadcast %9 : vector<16x1xf32> to vector<16x128xf32>
    %11 = arith.addf %7, %10 : vector<16x128xf32>
    %12 = arith.negf %11 : vector<16x128xf32>
    %13 = math.exp %12 : vector<16x128xf32>
    %cst_10 = arith.constant 1.000000e+00 : f32
    %14 = vector.broadcast %cst_10 : f32 to vector<16x128xf32>
    %15 = arith.addf %14, %13 : vector<16x128xf32>
    %16 = arith.divf %14, %15 : vector<16x128xf32>
    %17 = arith.mulf %11, %16 : vector<16x128xf32>
    %18 = tpu.iota {dimensions = array<i32: 1>} : vector<16x128xi32>
    %c0_11 = arith.constant 0 : index
    %c0_12 = arith.constant 0 : index
    %c0_13 = arith.constant 0 : index
    %c0_14 = arith.constant 0 : index
    %19 = vector.load %arg5[%c0_11, %c0_12, %c0_13, %c0_14] : memref<1x1x16x2xf32, #tpu.memory_space<vmem>>, vector<1x1x16x2xf32>
    %20 = vector.shape_cast %19 : vector<1x1x16x2xf32> to vector<16x2xf32>
    %c0_i32 = arith.constant 0 : i32
    %21 = vector.broadcast %c0_i32 : i32 to vector<16x128xi32>
    %22 = arith.cmpi eq, %18, %21 : vector<16x128xi32>
    %23 = vector.extract_strided_slice %20 {offsets = [0, 0], sizes = [16, 1], strides = [1, 1]} : vector<16x2xf32> to vector<16x1xf32>
    %c1_i32 = arith.constant 1 : i32
    %24 = tpu.dynamic_rotate %17 by %c1_i32 dim 1 : vector<16x128xf32>, i32 -> vector<16x128xf32>
    %25 = vector.shape_cast %23 : vector<16x1xf32> to vector<16x1xf32>
    %26 = vector.broadcast %25 : vector<16x1xf32> to vector<16x128xf32>
    %27 = arith.select %22, %26, %24 : vector<16x128xi1>, vector<16x128xf32>
    %c127_i32 = arith.constant 127 : i32
    %28 = vector.broadcast %c127_i32 : i32 to vector<16x128xi32>
    %29 = arith.cmpi eq, %18, %28 : vector<16x128xi32>
    %30 = vector.extract_strided_slice %20 {offsets = [0, 1], sizes = [16, 1], strides = [1, 1]} : vector<16x2xf32> to vector<16x1xf32>
    %c127_i32_15 = arith.constant 127 : i32
    %31 = tpu.dynamic_rotate %17 by %c127_i32_15 dim 1 : vector<16x128xf32>, i32 -> vector<16x128xf32>
    %32 = vector.shape_cast %30 : vector<16x1xf32> to vector<16x1xf32>
    %33 = vector.broadcast %32 : vector<16x1xf32> to vector<16x128xf32>
    %34 = arith.select %29, %33, %31 : vector<16x128xi1>, vector<16x128xf32>
    %c0_16 = arith.constant 0 : index
    %c0_17 = arith.constant 0 : index
    %c0_18 = arith.constant 0 : index
    %35 = vector.load %arg7[%c0_16, %c0_17, %c0_18] : memref<3x8x16xf32, #tpu.memory_space<vmem>>, vector<1x8x16xf32>
    %36 = vector.shape_cast %35 : vector<1x8x16xf32> to vector<8x16xf32>
    %cst_19 = arith.constant dense<0.000000e+00> : vector<8x128xf32>
    %37 = tpu.matmul %36, %27, %cst_19 {dimension_numbers = #tpu.dot_dimension_numbers<[1], [0], [0], [1], [0, 0, 1, 1], [], []>} : vector<8x16xf32>, vector<16x128xf32>, vector<8x128xf32> -> vector<8x128xf32>
    %c1 = arith.constant 1 : index
    %c0_20 = arith.constant 0 : index
    %c0_21 = arith.constant 0 : index
    %38 = vector.load %arg7[%c1, %c0_20, %c0_21] : memref<3x8x16xf32, #tpu.memory_space<vmem>>, vector<1x8x16xf32>
    %39 = vector.shape_cast %38 : vector<1x8x16xf32> to vector<8x16xf32>
    %cst_22 = arith.constant dense<0.000000e+00> : vector<8x128xf32>
    %40 = tpu.matmul %39, %17, %cst_22 {dimension_numbers = #tpu.dot_dimension_numbers<[1], [0], [0], [1], [0, 0, 1, 1], [], []>} : vector<8x16xf32>, vector<16x128xf32>, vector<8x128xf32> -> vector<8x128xf32>
    %41 = arith.addf %37, %40 : vector<8x128xf32>
    %c2 = arith.constant 2 : index
    %c0_23 = arith.constant 0 : index
    %c0_24 = arith.constant 0 : index
    %42 = vector.load %arg7[%c2, %c0_23, %c0_24] : memref<3x8x16xf32, #tpu.memory_space<vmem>>, vector<1x8x16xf32>
    %43 = vector.shape_cast %42 : vector<1x8x16xf32> to vector<8x16xf32>
    %cst_25 = arith.constant dense<0.000000e+00> : vector<8x128xf32>
    %44 = tpu.matmul %43, %34, %cst_25 {dimension_numbers = #tpu.dot_dimension_numbers<[1], [0], [0], [1], [0, 0, 1, 1], [], []>} : vector<8x16xf32>, vector<16x128xf32>, vector<8x128xf32> -> vector<8x128xf32>
    %45 = arith.addf %41, %44 : vector<8x128xf32>
    %46 = arith.addf %1, %45 : vector<8x128xf32>
    %c0_26 = arith.constant 0 : index
    %c0_27 = arith.constant 0 : index
    %47 = vector.load %arg8[%c0_26, %c0_27] : memref<8x1xf32, #tpu.memory_space<vmem>>, vector<8x1xf32>
    %48 = vector.broadcast %47 : vector<8x1xf32> to vector<8x128xf32>
    %49 = arith.addf %46, %48 : vector<8x128xf32>
    %c0_28 = arith.constant 0 : index
    %c0_29 = arith.constant 0 : index
    %c0_30 = arith.constant 0 : index
    %50 = vector.load %arg9[%c0_28, %c0_29, %c0_30] : memref<1x8x128xf32, #tpu.memory_space<vmem>>, vector<1x8x128xf32>
    %51 = vector.shape_cast %50 : vector<1x8x128xf32> to vector<8x128xf32>
    %52 = vector.shape_cast %49 : vector<8x128xf32> to vector<1x8x128xf32>
    tpu.vector_store %arg9[%c0_28, %c0_29, %c0_30], %52 {strides = array<i32>} : memref<1x8x128xf32, #tpu.memory_space<vmem>>, vector<1x8x128xf32>,
    return
  }
  func.func @transform_0(%arg0: i32, %arg1: i32) -> (i32, i32, i32) {
    %c0_i32 = arith.constant 0 : i32
    %c0_i32_0 = arith.constant 0 : i32
    return %arg0, %c0_i32, %arg1 : i32, i32, i32
  }
  func.func @transform_1(%arg0: i32, %arg1: i32) -> (i32, i32, i32) {
    %c0_i32 = arith.constant 0 : i32
    %c0_i32_0 = arith.constant 0 : i32
    %c0_i32_1 = arith.constant 0 : i32
    return %arg0, %c0_i32, %c0_i32_0 : i32, i32, i32
  }
  func.func @transform_2(%arg0: i32, %arg1: i32) -> (i32, i32, i32) {
    %c0_i32 = arith.constant 0 : i32
    %c0_i32_0 = arith.constant 0 : i32
    %c0_i32_1 = arith.constant 0 : i32
    return %arg0, %c0_i32, %c0_i32_0 : i32, i32, i32
  }
  func.func @transform_3(%arg0: i32, %arg1: i32) -> (i32, i32, i32, i32) {
    %c0_i32 = arith.constant 0 : i32
    %c0_i32_0 = arith.constant 0 : i32
    %c0_i32_1 = arith.constant 0 : i32
    return %arg0, %arg1, %c0_i32, %c0_i32_0 : i32, i32, i32, i32
  }
  func.func @transform_4(%arg0: i32, %arg1: i32) -> (i32, i32) {
    %c0_i32 = arith.constant 0 : i32
    %c0_i32_0 = arith.constant 0 : i32
    %c0_i32_1 = arith.constant 0 : i32
    return %c0_i32, %c0_i32_0 : i32, i32
  }
  func.func @transform_5(%arg0: i32, %arg1: i32) -> (i32, i32, i32) {
    %c0_i32 = arith.constant 0 : i32
    %c0_i32_0 = arith.constant 0 : i32
    %c0_i32_1 = arith.constant 0 : i32
    %c0_i32_2 = arith.constant 0 : i32
    return %c0_i32, %c0_i32_0, %c0_i32_1 : i32, i32, i32
  }
  func.func @transform_6(%arg0: i32, %arg1: i32) -> (i32, i32) {
    %c0_i32 = arith.constant 0 : i32
    %c0_i32_0 = arith.constant 0 : i32
    %c0_i32_1 = arith.constant 0 : i32
    return %c0_i32, %c0_i32_0 : i32, i32
  }
  func.func @transform_7(%arg0: i32, %arg1: i32) -> (i32, i32, i32) {
    %c0_i32 = arith.constant 0 : i32
    %c0_i32_0 = arith.constant 0 : i32
    return %arg0, %c0_i32, %arg1 : i32, i32, i32
  }
}

</mosaic_0001>

<llo_original>
// kernel: tpu_custom_call.1
$region0: #{tpu_custom_call.1}
  #allocation0 [shape = 'u32[]', space=smem, size = 0x4, offset = 0x4, fixed_abs, tag = 'smem constant byte address 0x4 - core index']
  #allocation1 [shape = 'u32[72,128]{1,0:T(1,128)}', space=vmem, size = 0x9000, scoped, tag = 'internal scratch']
  %s0 = inlined_call_operand.vmem [shape: f32[2,8,512], index: 0, kind: input, shape index: {}]
  %s1 = inlined_call_operand.vmem [shape: f32[2,16,1], index: 1, kind: input, shape index: {}]
  %s2 = inlined_call_operand.vmem [shape: f32[2,16,1], index: 2, kind: input, shape index: {}]
  %s3 = inlined_call_operand.vmem [shape: f32[2,4,16,2], index: 3, kind: input, shape index: {}]
  %s4 = inlined_call_operand.vmem [shape: f32[16,8], index: 4, kind: input, shape index: {}]
  %s5 = inlined_call_operand.vmem [shape: f32[3,8,16], index: 5, kind: input, shape index: {}]
  %s6 = inlined_call_operand.vmem [shape: f32[8,1], index: 6, kind: input, shape index: {}]
  %s7 = inlined_call_operand.hbm [shape: f32[2,8,512], index: 7, kind: output, shape index: {}]
  %s8 = sld [smem:[#allocation0]]
  $region61: #{tpu_custom_call.1} parent=0
    _
  %s10 = ssub.s32 1, %s8
  %s11 = scalar_select 0, %s10, %s8
  $region1: #{tpu_custom_call.1} parent=0
    #allocation2 [shape = 'u8[8192]{0}', space=vmem, size = 0x2000, scoped, tag = 'output window, operand 0']
    #allocation3 [shape = 's32[2]{0}', space=sflag, size = 0x8, scoped, tag = 'scoped memory for tpu_custom_call.1']
    %12 = vsyncpa [#allocation3], 0
    %s13 = scalar_lea.sflag [#allocation3], 1
    %14 = vsyncpa %s13, 0
    loop: start=0, step=1, limit=10
    $region2: #{tpu_custom_call.1} parent=1 // loop_pre_header
      _
    $region3: #{tpu_custom_call.1} parent=1 // loop_header
      %s16 = sphi 0, %s20
      %p17 = scmp.ge.s32.totalorder %s16, 10
      %s23 = sphi 0, %s35
      %s24 = sphi 0, %s31
      %s25 = sphi 0, %s23
      %s26 = sphi 0, %s24
      %s27 = sphi 0, %s25
      %s28 = sphi 0, %s26
      %s40 = sphi 0, %s42
      %s43 = sphi 0, %s40
      %s44 = sphi 0, %s43
      %s60 = sphi 0, %s44
      %s66 = sphi 0, %s68
      %s69 = sphi 0, %s66
      %s70 = sphi 0, %s69
      %s86 = sphi 0, %s70
      %s92 = sphi 0, %s94
      %s95 = sphi 0, %s92
      %s96 = sphi 0, %s95
      %s112 = sphi 0, %s96
      %s120 = sphi 0, %s122
      %s123 = sphi 0, %s120
      %s124 = sphi 0, %s123
      %s140 = sphi 0, %s124
      %s144 = sphi 0, %s144
      %s146 = sphi 0, %s144
      %s147 = sphi 0, %s146
      %s161 = sphi 0, %s147
      %s165 = sphi 0, %s165
      %s167 = sphi 0, %s165
      %s168 = sphi 0, %s167
      %s182 = sphi 0, %s168
      %s186 = sphi 0, %s186
      %s188 = sphi 0, %s186
      %s189 = sphi 0, %s188
      %s203 = sphi 0, %s189
      %s211 = sphi 0, %s213
      %s214 = sphi 0, %s211
      %s215 = sphi 0, %s214
      %s231 = sphi 0, %s215
    $region4: #{tpu_custom_call.1} parent=1 // loop_header_branch
      %19 = sbr.rel (%p17) target = $region8
    $region5: #{tpu_custom_call.1} parent=1 // loop_body
      %s21 = ssub.s32 %s16, 1
      %s22 = ssub.s32 %s16, 2
      %s29 = sadd.s32 1, %s24
      %p30 = scmp.ge.s32.totalorder %s29, 4
      %s31 = scalar_select %p30, 0, %s29
      %s32 = sadd.s32 1, %s23
      %s33 = scalar_select %p30, %s32, %s23
      %p34 = scmp.ge.s32.totalorder %s33, 2
      %s35 = scalar_select %p34, 0, %s33
      %s36 = ssub.s32 %s23, %s35
      %s37 = ssub.s32 %s24, %s31
      %s38 = sor.u32 %s36, %s37
      %p39 = scmp.eq.s32.totalorder %s38, 0
      %s41 = sadd.s32 %s40, 1
      %s42 = scalar_select %p39, %s40, %s41
      %p45 = pneg %p39
      %p46 = scmp.eq.s32.totalorder %s16, 7
      %p47 = por %p45, %p46
      %p48 = scmp.ne.s32.totalorder %s40, %s43
      %p49 = scmp.eq.s32.totalorder %s16, 0
      %p50 = por %p48, %p49
      %p51 = scmp.ne.s32.totalorder %s40, %s43
      %p52 = scmp.eq.s32.totalorder %s21, 7
      %p53 = por %p51, %p52
      %p54 = scmp.ne.s32.totalorder %s43, %s44
      %p55 = scmp.eq.s32.totalorder %s21, 0
      %p56 = por %p54, %p55
      %p57 = scmp.ne.s32.totalorder %s43, %s44
      %p58 = scmp.eq.s32.totalorder %s22, 7
      %p59 = por %p57, %p58
      %p61 = scmp.ne.s32.totalorder %s44, %s60
      %p62 = scmp.eq.s32.totalorder %s22, 0
      %p63 = por %p61, %p62
      %s64 = ssub.s32 %s23, %s35
      %p65 = scmp.eq.s32.totalorder %s64, 0
      %s67 = sadd.s32 %s66, 1
      %s68 = scalar_select %p65, %s66, %s67
      %p71 = pneg %p65
      %p72 = scmp.eq.s32.totalorder %s16, 7
      %p73 = por %p71, %p72
      %p74 = scmp.ne.s32.totalorder %s66, %s69
      %p75 = scmp.eq.s32.totalorder %s16, 0
      %p76 = por %p74, %p75
      %p77 = scmp.ne.s32.totalorder %s66, %s69
      %p78 = scmp.eq.s32.totalorder %s21, 7
      %p79 = por %p77, %p78
      %p80 = scmp.ne.s32.totalorder %s69, %s70
      %p81 = scmp.eq.s32.totalorder %s21, 0
      %p82 = por %p80, %p81
      %p83 = scmp.ne.s32.totalorder %s69, %s70
      %p84 = scmp.eq.s32.totalorder %s22, 7
      %p85 = por %p83, %p84
      %p87 = scmp.ne.s32.totalorder %s70, %s86
      %p88 = scmp.eq.s32.totalorder %s22, 0
      %p89 = por %p87, %p88
      %s90 = ssub.s32 %s23, %s35
      %p91 = scmp.eq.s32.totalorder %s90, 0
      %s93 = sadd.s32 %s92, 1
      %s94 = scalar_select %p91, %s92, %s93
      %p97 = pneg %p91
      %p98 = scmp.eq.s32.totalorder %s16, 7
      %p99 = por %p97, %p98
      %p100 = scmp.ne.s32.totalorder %s92, %s95
      %p101 = scmp.eq.s32.totalorder %s16, 0
      %p102 = por %p100, %p101
      %p103 = scmp.ne.s32.totalorder %s92, %s95
      %p104 = scmp.eq.s32.totalorder %s21, 7
      %p105 = por %p103, %p104
      %p106 = scmp.ne.s32.totalorder %s95, %s96
      %p107 = scmp.eq.s32.totalorder %s21, 0
      %p108 = por %p106, %p107
      %p109 = scmp.ne.s32.totalorder %s95, %s96
      %p110 = scmp.eq.s32.totalorder %s22, 7
      %p111 = por %p109, %p110
      %p113 = scmp.ne.s32.totalorder %s96, %s112
      %p114 = scmp.eq.s32.totalorder %s22, 0
      %p115 = por %p113, %p114
      %s116 = ssub.s32 %s23, %s35
      %s117 = ssub.s32 %s24, %s31
      %s118 = sor.u32 %s116, %s117
      %p119 = scmp.eq.s32.totalorder %s118, 0
      %s121 = sadd.s32 %s120, 1
      %s122 = scalar_select %p119, %s120, %s121
      %p125 = pneg %p119
      %p126 = scmp.eq.s32.totalorder %s16, 7
      %p127 = por %p125, %p126
      %p128 = scmp.ne.s32.totalorder %s120, %s123
      %p129 = scmp.eq.s32.totalorder %s16, 0
      %p130 = por %p128, %p129
      %p131 = scmp.ne.s32.totalorder %s120, %s123
      %p132 = scmp.eq.s32.totalorder %s21, 7
      %p133 = por %p131, %p132
      %p134 = scmp.ne.s32.totalorder %s123, %s124
      %p135 = scmp.eq.s32.totalorder %s21, 0
      %p136 = por %p134, %p135
      %p137 = scmp.ne.s32.totalorder %s123, %s124
      %p138 = scmp.eq.s32.totalorder %s22, 7
      %p139 = por %p137, %p138
      %p141 = scmp.ne.s32.totalorder %s124, %s140
      %p142 = scmp.eq.s32.totalorder %s22, 0
      %p143 = por %p141, %p142
      %s145 = sadd.s32 %s144, 1
      %p148 = scmp.eq.s32.totalorder %s16, 7
      %p149 = scmp.ne.s32.totalorder %s144, %s146
      %p150 = scmp.eq.s32.totalorder %s16, 0
      %p151 = por %p149, %p150
      %p152 = scmp.ne.s32.totalorder %s144, %s146
      %p153 = scmp.eq.s32.totalorder %s21, 7
      %p154 = por %p152, %p153
      %p155 = scmp.ne.s32.totalorder %s146, %s147
      %p156 = scmp.eq.s32.totalorder %s21, 0
      %p157 = por %p155, %p156
      %p158 = scmp.ne.s32.totalorder %s146, %s147
      %p159 = scmp.eq.s32.totalorder %s22, 7
      %p160 = por %p158, %p159
      %p162 = scmp.ne.s32.totalorder %s147, %s161
      %p163 = scmp.eq.s32.totalorder %s22, 0
      %p164 = por %p162, %p163
      %s166 = sadd.s32 %s165, 1
      %p169 = scmp.eq.s32.totalorder %s16, 7
      %p170 = scmp.ne.s32.totalorder %s165, %s167
      %p171 = scmp.eq.s32.totalorder %s16, 0
      %p172 = por %p170, %p171
      %p173 = scmp.ne.s32.totalorder %s165, %s167
      %p174 = scmp.eq.s32.totalorder %s21, 7
      %p175 = por %p173, %p174
      %p176 = scmp.ne.s32.totalorder %s167, %s168
      %p177 = scmp.eq.s32.totalorder %s21, 0
      %p178 = por %p176, %p177
      %p179 = scmp.ne.s32.totalorder %s167, %s168
      %p180 = scmp.eq.s32.totalorder %s22, 7
      %p181 = por %p179, %p180
      %p183 = scmp.ne.s32.totalorder %s168, %s182
      %p184 = scmp.eq.s32.totalorder %s22, 0
      %p185 = por %p183, %p184
      %s187 = sadd.s32 %s186, 1
      %p190 = scmp.eq.s32.totalorder %s16, 7
      %p191 = scmp.ne.s32.totalorder %s186, %s188
      %p192 = scmp.eq.s32.totalorder %s16, 0
      %p193 = por %p191, %p192
      %p194 = scmp.ne.s32.totalorder %s186, %s188
      %p195 = scmp.eq.s32.totalorder %s21, 7
      %p196 = por %p194, %p195
      %p197 = scmp.ne.s32.totalorder %s188, %s189
      %p198 = scmp.eq.s32.totalorder %s21, 0
      %p199 = por %p197, %p198
      %p200 = scmp.ne.s32.totalorder %s188, %s189
      %p201 = scmp.eq.s32.totalorder %s22, 7
      %p202 = por %p200, %p201
      %p204 = scmp.ne.s32.totalorder %s189, %s203
      %p205 = scmp.eq.s32.totalorder %s22, 0
      %p206 = por %p204, %p205
      %s207 = ssub.s32 %s23, %s35
      %s208 = ssub.s32 %s24, %s31
      %s209 = sor.u32 %s207, %s208
      %p210 = scmp.eq.s32.totalorder %s209, 0
      %s212 = sadd.s32 %s211, 1
      %s213 = scalar_select %p210, %s211, %s212
      %p216 = pneg %p210
      %p217 = scmp.eq.s32.totalorder %s16, 7
      %p218 = por %p216, %p217
      %p219 = scmp.ne.s32.totalorder %s211, %s214
      %p220 = scmp.eq.s32.totalorder %s16, 0
      %p221 = por %p219, %p220
      %p222 = scmp.ne.s32.totalorder %s211, %s214
      %p223 = scmp.eq.s32.totalorder %s21, 7
      %p224 = por %p222, %p223
      %p225 = scmp.ne.s32.totalorder %s214, %s215
      %p226 = scmp.eq.s32.totalorder %s21, 0
      %p227 = por %p225, %p226
      %p228 = scmp.ne.s32.totalorder %s214, %s215
      %p229 = scmp.eq.s32.totalorder %s22, 7
      %p230 = por %p228, %p229
      %p232 = scmp.ne.s32.totalorder %s215, %s231
      %p233 = scmp.eq.s32.totalorder %s22, 0
      %p234 = por %p232, %p233
      %p235 = scmp.le.s32.totalorder 1, %s16
      %p236 = scmp.lt.s32.totalorder %s16, 9
      %p237 = pnand %p235, %p236
      %p238 = pneg %p237
      // Predicated region
      $region9: #{tpu_custom_call.1} parent=5 // pred_check
        _
      $region10: #{tpu_custom_call.1} parent=5 // pred_check_branch
        %240 = sbr.rel (%p237) target = $region12
      $region11: #{tpu_custom_call.1} parent=5 // pred_region
        %s241 = ssub.s32 %s16, 1
        // Predicated region
        $region13: #{tpu_custom_call.1} parent=11 // pred_check
          %p242 = pneg %p157
        $region14: #{tpu_custom_call.1} parent=11 // pred_check_branch
          %244 = sbr.rel (%p242) target = $region16
        $region15: #{tpu_custom_call.1} parent=11 // pred_region
          _
        $region16: #{tpu_custom_call.1} parent=11 // pred_fallthru
          _
        // Predicated region
        $region17: #{tpu_custom_call.1} parent=11 // pred_check
          %p245 = pneg %p178
        $region18: #{tpu_custom_call.1} parent=11 // pred_check_branch
          %247 = sbr.rel (%p245) target = $region20
        $region19: #{tpu_custom_call.1} parent=11 // pred_region
          _
        $region20: #{tpu_custom_call.1} parent=11 // pred_fallthru
          _
        // Predicated region
        $region21: #{tpu_custom_call.1} parent=11 // pred_check
          %p248 = pneg %p199
        $region22: #{tpu_custom_call.1} parent=11 // pred_check_branch
          %250 = sbr.rel (%p248) target = $region24
        $region23: #{tpu_custom_call.1} parent=11 // pred_region
          _
        $region24: #{tpu_custom_call.1} parent=11 // pred_fallthru
          _
      $region12: #{tpu_custom_call.1} parent=5 // pred_fallthru
        _
      %p251 = scmp.lt.s32.totalorder %s16, 8
      // Predicated region
      $region25: #{tpu_custom_call.1} parent=5 // pred_check
        %p252 = pneg %p251
      $region26: #{tpu_custom_call.1} parent=5 // pred_check_branch
        %254 = sbr.rel (%p252) target = $region28
      $region27: #{tpu_custom_call.1} parent=5 // pred_region
        // Predicated region
        $region29: #{tpu_custom_call.1} parent=27 // pred_check
          %p255 = pneg %p50
        $region30: #{tpu_custom_call.1} parent=27 // pred_check_branch
          %257 = sbr.rel (%p255) target = $region32
        $region31: #{tpu_custom_call.1} parent=27 // pred_region
          %p258 = scmp.lt.s32.totalorder %s23, 1
          %s259 = scalar_select %p258, %s23, 1
          %p260 = scmp.lt.s32.totalorder %s24, 3
          %s261 = scalar_select %p260, %s24, 3
          %s262 = smul.addr %s259, 4
          %s263 = sadd.s32 %s261, %s262
          %s264 = smul.addr %s263, 8
          %s265 = scalar_lea.vmem %s0, %s264
        $region32: #{tpu_custom_call.1} parent=27 // pred_fallthru
          _
        // Predicated region
        $region33: #{tpu_custom_call.1} parent=27 // pred_check
          %p266 = pneg %p76
        $region34: #{tpu_custom_call.1} parent=27 // pred_check_branch
          %268 = sbr.rel (%p266) target = $region36
        $region35: #{tpu_custom_call.1} parent=27 // pred_region
          %p269 = scmp.lt.s32.totalorder %s23, 1
          %s270 = scalar_select %p269, %s23, 1
          %s271 = smul.addr %s270, 2
          %s272 = smul.addr %s271, 8
          %s273 = scalar_lea.vmem %s1, %s272
        $region36: #{tpu_custom_call.1} parent=27 // pred_fallthru
          _
        // Predicated region
        $region37: #{tpu_custom_call.1} parent=27 // pred_check
          %p274 = pneg %p102
        $region38: #{tpu_custom_call.1} parent=27 // pred_check_branch
          %276 = sbr.rel (%p274) target = $region40
        $region39: #{tpu_custom_call.1} parent=27 // pred_region
          %p277 = scmp.lt.s32.totalorder %s23, 1
          %s278 = scalar_select %p277, %s23, 1
          %s279 = smul.addr %s278, 2
          %s280 = smul.addr %s279, 8
          %s281 = scalar_lea.vmem %s2, %s280
        $region40: #{tpu_custom_call.1} parent=27 // pred_fallthru
          _
        // Predicated region
        $region41: #{tpu_custom_call.1} parent=27 // pred_check
          %p282 = pneg %p130
        $region42: #{tpu_custom_call.1} parent=27 // pred_check_branch
          %284 = sbr.rel (%p282) target = $region44
        $region43: #{tpu_custom_call.1} parent=27 // pred_region
          %p285 = scmp.lt.s32.totalorder %s23, 1
          %s286 = scalar_select %p285, %s23, 1
          %p287 = scmp.lt.s32.totalorder %s24, 3
          %s288 = scalar_select %p287, %s24, 3
          %s289 = smul.addr %s288, 2
          %s290 = smul.addr %s286, 8
          %s291 = sadd.s32 %s289, %s290
          %s292 = smul.addr %s291, 8
          %s293 = scalar_lea.vmem %s3, %s292
        $region44: #{tpu_custom_call.1} parent=27 // pred_fallthru
          _
      $region28: #{tpu_custom_call.1} parent=5 // pred_fallthru
        _
      %p294 = scmp.le.s32.totalorder 1, %s16
      %p295 = scmp.lt.s32.totalorder %s16, 9
      %p296 = pnand %p294, %p295
      %p297 = pneg %p296
      // Predicated region
      $region45: #{tpu_custom_call.1} parent=5 // pred_check
        _
      $region46: #{tpu_custom_call.1} parent=5 // pred_check_branch
        %299 = sbr.rel (%p296) target = $region48
      $region47: #{tpu_custom_call.1} parent=5 // pred_region
        %s300 = ssub.s32 %s16, 1
        %p301 = scmp.lt.s32.totalorder %s25, 1
        %s302 = scalar_select %p301, %s25, 1
        %p303 = scmp.lt.s32.totalorder %s26, 3
        %s304 = scalar_select %p303, %s26, 3
        %s305 = smul.addr %s302, 4
        %s306 = sadd.s32 %s304, %s305
        %s307 = smul.addr %s306, 8
        %s308 = scalar_lea.vmem %s0, %s307
        %p309 = pneg %p56
        %p310 = pneg %p53
        %p311 = scmp.lt.s32.totalorder %s25, 1
        %s312 = scalar_select %p311, %s25, 1
        %s313 = smul.addr %s312, 2
        %s314 = smul.addr %s313, 8
        %s315 = scalar_lea.vmem %s1, %s314
        %p316 = pneg %p82
        %p317 = pneg %p79
        %p318 = scmp.lt.s32.totalorder %s25, 1
        %s319 = scalar_select %p318, %s25, 1
        %s320 = smul.addr %s319, 2
        %s321 = smul.addr %s320, 8
        %s322 = scalar_lea.vmem %s2, %s321
        %p323 = pneg %p108
        %p324 = pneg %p105
        %p325 = scmp.lt.s32.totalorder %s25, 1
        %s326 = scalar_select %p325, %s25, 1
        %p327 = scmp.lt.s32.totalorder %s26, 3
        %s328 = scalar_select %p327, %s26, 3
        %s329 = smul.addr %s328, 2
        %s330 = smul.addr %s326, 8
        %s331 = sadd.s32 %s329, %s330
        %s332 = smul.addr %s331, 8
        %s333 = scalar_lea.vmem %s3, %s332
        %p334 = pneg %p136
        %p335 = pneg %p133
        %p336 = pneg %p157
        %p337 = pneg %p154
        %p338 = pneg %p178
        %p339 = pneg %p175
        %p340 = pneg %p199
        %p341 = pneg %p196
        %p342 = pneg %p227
        %p343 = pneg %p224
        %s344 = sand.u32 %s214, 1
        %s345 = scalar_lea.sflag [#allocation3], %s344
        %s346 = sand.u32 %s214, 1
        %s347 = smul.addr %s346, 8
        %s348 = scalar_lea.vmem [#allocation2], %s347
        %p349 = scmp.lt.s32.totalorder %s25, 1
        %s350 = scalar_select %p349, %s25, 1
        %p351 = scmp.lt.s32.totalorder %s26, 3
        %s352 = scalar_select %p351, %s26, 3
        %s353 = smul.addr %s350, 4
        %s354 = sadd.s32 %s352, %s353
        %s355 = smul.addr %s354, 8
        %s356 = scalar_lea.vmem %s0, %s355
        %p357 = scmp.lt.s32.totalorder %s25, 1
        %s358 = scalar_select %p357, %s25, 1
        %s359 = smul.addr %s358, 2
        %s360 = smul.addr %s359, 8
        %s361 = scalar_lea.vmem %s1, %s360
        %p362 = scmp.lt.s32.totalorder %s25, 1
        %s363 = scalar_select %p362, %s25, 1
        %s364 = smul.addr %s363, 2
        %s365 = smul.addr %s364, 8
        %s366 = scalar_lea.vmem %s2, %s365
        %p367 = scmp.lt.s32.totalorder %s25, 1
        %s368 = scalar_select %p367, %s25, 1
        %p369 = scmp.lt.s32.totalorder %s26, 3
        %s370 = scalar_select %p369, %s26, 3
        %s371 = smul.addr %s370, 2
        %s372 = smul.addr %s368, 8
        %s373 = sadd.s32 %s371, %s372
        %s374 = smul.addr %s373, 8
        %s375 = scalar_lea.vmem %s3, %s374
        %v376 = vld [vmem:[%s356] sm:$0xff]
        %v377 = vld [vmem:[%s4] sm:$0xff]
        %v378 = vld [vmem:[%s4 + $0x8] sm:$0xff]
        %vm379 = vcmask 64512
        %v381 = vsel %vm379, %v377, 0
        %v384 = vsel %vm379, %v378, 0
        %386 = vmatpush.msra.mxu0 0.0
        %387 = vmatpush.msra.mxu0 0.0
        %388 = vmatpush.msra.mxu0 0.0
        %389 = vmatpush.msra.mxu0 0.0
        %390 = vmatpush.msra.mxu0 0.0
        %391 = vmatpush.msra.mxu0 0.0
        %392 = vmatpush.msra.mxu0 0.0
        %393 = vmatpush.msra.mxu0 0.0
        %394 = vmatpush.msra.mxu0 0.0
        %395 = vmatpush.msra.mxu0 0.0
        %396 = vmatpush.msra.mxu0 0.0
        %397 = vmatpush.msra.mxu0 0.0
        %398 = vmatpush.msra.mxu0 0.0
        %399 = vmatpush.msra.mxu0 0.0
        %400 = vmatpush.msra.mxu0 0.0
        %401 = vmatpush.msra.mxu0 %v376
        %402 = vmatmul.f32.gmra.mxu0 %v381
        %v403 = vpop.f32.mrf.mxu0
        %v404 = vadd.f32 0.0, %v403
        %405 = vmatmul.f32.gmra.mxu0 %v384
        %v406 = vpop.f32.mrf.mxu0
        %v407 = vadd.f32 0.0, %v406
        %408 = vdwg.mxu0
        %v409 = vld [vmem:[%s361] sm:$0xff]
        %v410 = vld [vmem:[%s361 + $0x8] sm:$0xff]
        %412 = vset.pattern.permute.xlu0 0
        %413 = vperm.xlu0 %412, %v409
        %v414 = vpop.permute.xlu0 %413
        %417 = vset.pattern.permute.xlu0 0
        %418 = vperm.xlu0 %417, %v410
        %v419 = vpop.permute.xlu0 %418
        %v421 = vmul.f32 %v404, %v414
        %v422 = vmul.f32 %v407, %v419
        %v423 = vld [vmem:[%s366] sm:$0xff]
        %v424 = vld [vmem:[%s366 + $0x8] sm:$0xff]
        %426 = vset.pattern.permute.xlu0 0
        %427 = vperm.xlu0 %426, %v423
        %v428 = vpop.permute.xlu0 %427
        %431 = vset.pattern.permute.xlu0 0
        %432 = vperm.xlu0 %431, %v424
        %v433 = vpop.permute.xlu0 %432
        %v435 = vadd.f32 %v421, %v428
        %v436 = vadd.f32 %v422, %v433
        %v437 = vxor.u32 %v435, 2147483648
        %v438 = vxor.u32 %v436, 2147483648
        %v439 = vmul.f32 %v437, 1.442695
        %v440 = vpow.pop %v439
        %v441 = vmul.f32 %v438, 1.442695
        %v442 = vpow.pop %v441
        %v443 = vadd.f32 %v440, 1.0
        %v444 = vadd.f32 %v442, 1.0
        %v445 = vrcp.pop %v443
        %v446 = vmul.f32 %v443, %v445
        %v447 = vsub.f32 1.0, %v446
        %v448 = vmul.f32 %v445, %v447
        %v449 = vadd.f32 %v445, %v448
        %vm450 = vweird.f32 %v443
        %vm451 = vweird.f32 %v445
        %vm452 = vmor %vm450, %vm451
        %v453 = vsel %vm452, %v445, %v449
        %v454 = vand.u32 2147483647, %v443
        %vm455 = vcmp.eq.f32.partialorder %v454, 8.507059e+37
        %v456 = vand.u32 %v443, 2147483648
        %v457 = vor.u32 1.1754944e-38, %v456
        %v458 = vsel %vm455, %v457, %v453
        %v459 = vmul.f32 1.0, %v458
        %v460 = vrcp.pop %v444
        %v461 = vmul.f32 %v444, %v460
        %v462 = vsub.f32 1.0, %v461
        %v463 = vmul.f32 %v460, %v462
        %v464 = vadd.f32 %v460, %v463
        %vm465 = vweird.f32 %v444
        %vm466 = vweird.f32 %v460
        %vm467 = vmor %vm465, %vm466
        %v468 = vsel %vm467, %v460, %v464
        %v469 = vand.u32 2147483647, %v444
        %vm470 = vcmp.eq.f32.partialorder %v469, 8.507059e+37
        %v471 = vand.u32 %v444, 2147483648
        %v472 = vor.u32 1.1754944e-38, %v471
        %v473 = vsel %vm470, %v472, %v468
        %v474 = vmul.f32 1.0, %v473
        %v475 = vmul.f32 %v435, %v459
        %v476 = vmul.f32 %v436, %v474
        %v477 = vlaneseq
        %v478 = vand.u32 %v477, 127
        %v479 = vld [vmem:[%s375] sm:$0xff]
        %v480 = vld [vmem:[%s375 + $0x8] sm:$0xff]
        %vm481 = vcmp.eq.s32.totalorder %v478, 0
        %482 = vrot.lane.b32.xlu0 %v475, 1
        %v483 = vpop.permute.xlu0 %482
        %484 = vrot.lane.b32.xlu0 %v476, 1
        %v485 = vpop.permute.xlu0 %484
        %487 = vset.pattern.permute.xlu0 0
        %488 = vperm.xlu0 %487, %v479
        %v489 = vpop.permute.xlu0 %488
        %492 = vset.pattern.permute.xlu0 0
        %493 = vperm.xlu0 %492, %v480
        %v494 = vpop.permute.xlu0 %493
        %v496 = vsel %vm481, %v489, %v483
        %v497 = vsel %vm481, %v494, %v485
        %vm498 = vcmp.eq.s32.totalorder %v478, 127
        %499 = vrot.lane.b32.xlu0 %v475, 127
        %v500 = vpop.permute.xlu0 %499
        %501 = vrot.lane.b32.xlu0 %v476, 127
        %v502 = vpop.permute.xlu0 %501
        %503 = vset.pattern.permute.xlu0 1
        %504 = vperm.xlu0 %503, %v479
        %v505 = vpop.permute.xlu0 %504
        %507 = vset.pattern.permute.xlu0 1
        %508 = vperm.xlu0 %507, %v480
        %v509 = vpop.permute.xlu0 %508
        %v511 = vsel %vm498, %v505, %v500
        %v512 = vsel %vm498, %v509, %v502
        %v513 = vld [vmem:[%s5] sm:$0xff]
        %s514 = scalar_lea.vmem %s5, 8
        %v515 = vld [vmem:[%s514] sm:$0xff]
        %vm516 = vcmask 130048
        %v518 = vsel %vm516, %v515, 0
        %520 = vmatpush.msra.mxu0 0.0
        %521 = vmatpush.msra.mxu0 0.0
        %522 = vmatpush.msra.mxu0 0.0
        %523 = vmatpush.msra.mxu0 0.0
        %524 = vmatpush.msra.mxu0 0.0
        %525 = vmatpush.msra.mxu0 0.0
        %526 = vmatpush.msra.mxu0 0.0
        %527 = vmatpush.msra.mxu0 0.0
        %528 = vmatpush.msra.mxu0 0.0
        %529 = vmatpush.msra.mxu0 0.0
        %530 = vmatpush.msra.mxu0 0.0
        %531 = vmatpush.msra.mxu0 0.0
        %532 = vmatpush.msra.mxu0 0.0
        %533 = vmatpush.msra.mxu0 0.0
        %534 = vmatpush.msra.mxu0 %v476
        %535 = vmatpush.msra.mxu0 %v475
        %536 = vmatmul.f32.gmra.mxu0 %v518
        %v537 = vpop.f32.mrf.mxu0
        %v538 = vadd.f32 0.0, %v537
        %539 = vdwg.mxu0
        %v541 = vsel %vm516, %v513, 0
        %543 = vmatpush.msra.mxu0 0.0
        %544 = vmatpush.msra.mxu0 0.0
        %545 = vmatpush.msra.mxu0 0.0
        %546 = vmatpush.msra.mxu0 0.0
        %547 = vmatpush.msra.mxu0 0.0
        %548 = vmatpush.msra.mxu0 0.0
        %549 = vmatpush.msra.mxu0 0.0
        %550 = vmatpush.msra.mxu0 0.0
        %551 = vmatpush.msra.mxu0 0.0
        %552 = vmatpush.msra.mxu0 0.0
        %553 = vmatpush.msra.mxu0 0.0
        %554 = vmatpush.msra.mxu0 0.0
        %555 = vmatpush.msra.mxu0 0.0
        %556 = vmatpush.msra.mxu0 0.0
        %557 = vmatpush.msra.mxu0 %v497
        %558 = vmatpush.msra.mxu0 %v496
        %559 = vmatmul.f32.gmra.mxu0 %v541
        %v560 = vpop.f32.mrf.mxu0
        %v561 = vadd.f32 %v538, %v560
        %562 = vdwg.mxu0
        %s563 = scalar_lea.vmem %s5, 16
        %v564 = vld [vmem:[%s563] sm:$0xff]
        %v566 = vsel %vm516, %v564, 0
        %568 = vmatpush.msra.mxu0 0.0
        %569 = vmatpush.msra.mxu0 0.0
        %570 = vmatpush.msra.mxu0 0.0
        %571 = vmatpush.msra.mxu0 0.0
        %572 = vmatpush.msra.mxu0 0.0
        %573 = vmatpush.msra.mxu0 0.0
        %574 = vmatpush.msra.mxu0 0.0
        %575 = vmatpush.msra.mxu0 0.0
        %576 = vmatpush.msra.mxu0 0.0
        %577 = vmatpush.msra.mxu0 0.0
        %578 = vmatpush.msra.mxu0 0.0
        %579 = vmatpush.msra.mxu0 0.0
        %580 = vmatpush.msra.mxu0 0.0
        %581 = vmatpush.msra.mxu0 0.0
        %582 = vmatpush.msra.mxu0 %v512
        %583 = vmatpush.msra.mxu0 %v511
        %584 = vmatmul.f32.gmra.mxu0 %v566
        %v585 = vpop.f32.mrf.mxu0
        %v586 = vadd.f32 0.0, %v585
        %587 = vdwg.mxu0
        %v588 = vadd.f32 %v561, %v586
        %v589 = vadd.f32 %v376, %v588
        %v590 = vld [vmem:[%s6] sm:$0xff]
        %592 = vset.pattern.permute.xlu0 0
        %593 = vperm.xlu0 %592, %v590
        %v594 = vpop.permute.xlu0 %593
        %v596 = vadd.f32 %v589, %v594
        %597 = vst [vmem:[%s348] sm:$0xff] %v596
        %s598 = sand.u32 %s214, 1
        %s599 = scalar_lea.sflag [#allocation3], %s598
        %s600 = sand.u32 %s214, 1
        %s601 = smul.addr %s600, 8
        %s602 = scalar_lea.vmem [#allocation2], %s601
        // Predicated region
        $region49: #{tpu_custom_call.1} parent=47 // pred_check
          %p603 = pneg %p224
        $region50: #{tpu_custom_call.1} parent=47 // pred_check_branch
          %605 = sbr.rel (%p603) target = $region52
        $region51: #{tpu_custom_call.1} parent=47 // pred_region
          %607 = vsyncadd %s599, 0
          %s608 = smul.addr %s25, 4
          %s609 = sadd.s32 %s26, %s608
          %s610 = smul.addr %s609, 8
          %s611 = scalar_lea.hbm %s7, %s610
          %s613 = sshll.u32 %s602, 4
          %s614 = int_to_ptr.vmem [resolvable:$true] %s613
          %s615 = sshll.u32 %s611, 4
          %s616 = int_to_ptr.hbm [resolvable:$true] %s615
          %618 = dma.vmem_to_hbm [thread:$0]  %s614, 128, %s616, %s599
        $region52: #{tpu_custom_call.1} parent=47 // pred_fallthru
          _
      $region48: #{tpu_custom_call.1} parent=5 // pred_fallthru
        _
      %p619 = scmp.le.s32.totalorder 2, %s16
      // Predicated region
      $region53: #{tpu_custom_call.1} parent=5 // pred_check
        %p620 = pneg %p619
      $region54: #{tpu_custom_call.1} parent=5 // pred_check_branch
        %622 = sbr.rel (%p620) target = $region56
      $region55: #{tpu_custom_call.1} parent=5 // pred_region
        %s623 = ssub.s32 %s16, 2
        // Predicated region
        $region57: #{tpu_custom_call.1} parent=55 // pred_check
          %p624 = pneg %p230
        $region58: #{tpu_custom_call.1} parent=55 // pred_check_branch
          %626 = sbr.rel (%p624) target = $region60
        $region59: #{tpu_custom_call.1} parent=55 // pred_region
          %s627 = sand.u32 %s215, 1
          %s628 = scalar_lea.sflag [#allocation3], %s627
          %s629 = sand.u32 %s215, 1
          %s630 = smul.addr %s629, 8
          %s631 = scalar_lea.vmem [#allocation2], %s630
          %633 = dma.done %s628, 128
        $region60: #{tpu_custom_call.1} parent=55 // pred_fallthru
          _
      $region56: #{tpu_custom_call.1} parent=5 // pred_fallthru
        _
    $region6: #{tpu_custom_call.1} parent=1 // loop_footer
      %s20 = sadd.s32 1, %s16
    $region7: #{tpu_custom_call.1} parent=1 // loop_footer_branch
      %15 = sbr.rel target = $region3
    $region8: #{tpu_custom_call.1} parent=1 // loop_exit
      _
    %634 = vsyncpa [#allocation3], 1
    %s635 = scalar_lea.sflag [#allocation3], 1
    %636 = vsyncpa %s635, 1

</llo_original>
